<compile_context>
chip_gen: v5e
topology: v5e:2x2
jax: 0.10.0
libtpu: 0.0.40
codegen_flags: <defaults>
</compile_context>

<pallas_src>
import functools

import jax
import jax.numpy as jnp
from jax.experimental import pallas as pl
from jax.experimental.pallas import tpu as pltpu

LANE = 128


def _round_up(n: int, m: int) -> int:
    return ((n + m - 1) // m) * m


def _sublane(dtype) -> int:
    # 32-bit: 8 rows per vreg; 16-bit packs 16; 8-bit packs 32 along sublanes.
    return {4: 8, 2: 16, 1: 32}.get(jnp.dtype(dtype).itemsize, 8)


def _vmem_capacity_bytes() -> int:
    try:
        return int(pltpu.get_tpu_info().vmem_capacity_bytes)
    except Exception:
        return 64 << 20  # conservative default (v7x per-TensorCore VMEM)


def _apply_activation(y, activation, leaky_slope, softmax_dim, out_f, logical_batch):
    """Static (trace-time) activation selection; math runs in-kernel on f32."""
    if activation == "none":
        return y
    if activation == "relu":
        return jnp.maximum(y, 0.0)
    if activation == "leaky_relu":
        return jnp.where(y >= 0.0, y, leaky_slope * y)
    if activation == "sigmoid":
        # Single EUP tanh instead of exp + reciprocal; exact and frees the EUP slot.
        return 0.5 * jnp.tanh(0.5 * y) + 0.5
    if activation == "tanh":
        return jnp.tanh(y)
    if activation == "softmax":
        axis = softmax_dim if softmax_dim >= 0 else y.ndim + softmax_dim
        if axis == 1:
            # Mask padded feature lanes so they don't pollute the denominator.
            lane = jax.lax.broadcasted_iota(jnp.int32, y.shape, 1)
            y = jnp.where(lane < out_f, y, -jnp.inf)
        else:  # axis == 0: softmax over the batch axis (whole batch in one block).
            row = jax.lax.broadcasted_iota(jnp.int32, y.shape, 0)
            y = jnp.where(row < logical_batch, y, -jnp.inf)
        m = jnp.max(y, axis=axis, keepdims=True)
        e = jnp.exp(y - m)
        s = jnp.sum(e, axis=axis, keepdims=True)
        return e * pl.reciprocal(s, approx=True)  # EUP vrcp; ~1e-3 rel error
    raise ValueError(f"unknown activation: {activation}")


def _mlp_kernel(x_ref, *refs, layer_meta, leaky_slope, softmax_dim, logical_batch):
    """Fused MLP: refs = (w0, b0, w1, b1, ..., o_ref)."""
    o_ref = refs[-1]
    wb_refs = refs[:-1]
    n_layers = len(layer_meta)
    op_dtype = wb_refs[0].dtype  # matmul operand dtype == stored weight dtype

    h = x_ref[...].astype(op_dtype)  # explicit cast -> no silent promotion in dot
    for i, (act, out_f) in enumerate(layer_meta):
        w_ref = wb_refs[2 * i]
        b_ref = wb_refs[2 * i + 1]
        # y = h @ W  (W pre-stored as (in_pad, out_pad): no transpose, lane-dense out)
        y = jnp.dot(h, w_ref[...], preferred_element_type=jnp.float32)
        y = y + b_ref[...].astype(jnp.float32)  # (1, out_pad) broadcasts over batch
        y = _apply_activation(y, act, leaky_slope, softmax_dim, out_f, logical_batch)
        if i + 1 < n_layers:
            h = y.astype(op_dtype)
        else:
            o_ref[...] = y.astype(o_ref.dtype)


def _resident_spec(shape, single_buffer):
    """Spec for a VMEM-resident operand (constant index_map)."""
    idx = lambda i: (0, 0)
    if single_buffer and hasattr(pl, "Buffered"):
        try:
            return pl.BlockSpec(shape, idx, pipeline_mode=pl.Buffered(1))
        except TypeError:
            pass
    return pl.BlockSpec(shape, idx)


class PerceptronPallas:
    """JAX/Pallas equivalent of the PyTorch Perceptron module (fused forward)."""

    def __init__(self, input_size, hidden_size, output_size,
                 hidden_activation="relu", output_activation="none",
                 leaky_slope=0.01, softmax_dim=0, key=None,
                 dtype=jnp.float32, compute_dtype=None):
        layer_sizes = [input_size] + list(hidden_size) + [output_size]
        if key is None:
            key = jax.random.PRNGKey(0)
        param_dtype = dtype if compute_dtype is None else compute_dtype

        self.params = []          # logical (out_f, in_f) weights, (out_f,) biases
        self.padded_params = []   # (in_pad, out_pad) pre-transposed, (1, out_pad) bias
        self.layer_meta = []      # (activation, logical out_features)
        self.leaky_slope = float(leaky_slope)
        self.softmax_dim = int(softmax_dim)
        self.output_size = int(output_size)
        self.param_dtype = param_dtype

        n_layers = len(layer_sizes) - 1
        for i in range(n_layers):
            in_f, out_f = layer_sizes[i], layer_sizes[i + 1]
            key, wk, bk = jax.random.split(key, 3)
            # Match nn.Linear's uniform(-1/sqrt(in_f), 1/sqrt(in_f)) init.
            bound = 1.0 / (in_f ** 0.5)
            w = jax.random.uniform(wk, (out_f, in_f), dtype, -bound, bound)
            b = jax.random.uniform(bk, (out_f,), dtype, -bound, bound)
            self.params.append((w, b))

            in_pad = _round_up(in_f, LANE)
            out_pad = _round_up(out_f, LANE)
            # Zero padding is load-bearing: the next layer relies on padded weight
            # ROWS being exactly zero so padded activation lanes contribute nothing.
            wp = jnp.zeros((in_pad, out_pad), param_dtype).at[:in_f, :out_f].set(
                w.T.astype(param_dtype))
            bp = jnp.zeros((1, out_pad), param_dtype).at[:, :out_f].set(
                b.astype(param_dtype))
            self.padded_params.append((wp, bp))

            is_last = i == n_layers - 1
            act = output_activation if is_last else hidden_activation
            self.layer_meta.append((act, out_f))

    def __call__(self, x):
        batch, in_f = x.shape
        out_dtype = x.dtype
        in_pad = self.padded_params[0][0].shape[0]
        out_pad_last = self.padded_params[-1][0].shape[1]
        max_out_pad = max(wp.shape[1] for wp, _ in self.padded_params)

        # ---- softmax routing ------------------------------------------------
        sm_axis = self.softmax_dim if self.softmax_dim >= 0 else 2 + self.softmax_dim
        kernel_meta = list(self.layer_meta)
        apply_final_softmax0 = False
        softmax_over_batch_hidden = False
        for i, (act, of) in enumerate(kernel_meta):
            if act == "softmax" and sm_axis == 0:
                if i == len(kernel_meta) - 1:
                    # Output-layer batch-axis softmax: keep batch tiling in the
                    # kernel, do the exact normalization as a cheap second pass.
                    kernel_meta[i] = ("none", of)
                    apply_final_softmax0 = True
                else:
                    softmax_over_batch_hidden = True

        # ---- tile-size selection with an explicit VMEM budget ----------------
        sub = max(_sublane(x.dtype), _sublane(out_dtype), _sublane(self.param_dtype))
        x_isz = jnp.dtype(x.dtype).itemsize
        o_isz = jnp.dtype(out_dtype).itemsize
        weight_bytes = sum(int(wp.size) * wp.dtype.itemsize +
                           int(bp.size) * bp.dtype.itemsize
                           for wp, bp in self.padded_params)
        single_buffer_weights = hasattr(pl, "Buffered")
        wb_mult = 1 if single_buffer_weights else 2

        def tile_bytes(tm):
            return (2 * tm * in_pad * x_isz          # double-buffered x tile
                    + 2 * tm * out_pad_last * o_isz  # double-buffered out tile
                    + 2 * tm * max_out_pad * 4)      # f32 intermediates headroom

        vmem_cap = _vmem_capacity_bytes()
        budget = int(vmem_cap * 0.8)

        if softmax_over_batch_hidden:
            # Hidden-layer normalization spans batch: whole batch in one block.
            tm = _round_up(batch, sub)
        elif batch <= 128:
            if batch >= 2 * sub:
                # Two tiles keep both v7x TensorCores busy; harmless on v5e/v6e.
                tm = _round_up(-(-batch // 2), sub)
            else:
                tm = _round_up(batch, sub)
        else:
            tm = 128
            for cand in (512, 256, 128):
                if cand <= _round_up(batch, sub) and \
                        wb_mult * weight_bytes + tile_bytes(cand) <= budget:
                    tm = cand
                    break
        grid_m = -(-batch // tm)
        # TODO(synk): stream oversized layer weights (K-tiled via memory_space=pl.ANY
        # + emit_pipeline) when Σ weights cannot stay VMEM-resident (e.g. 4096² f32 on v7x).

        # ---- input padding (feature dim only; batch tail tiles may over-run) --
        if softmax_over_batch_hidden:
            rows_pad = tm * grid_m
            xp = x
            if rows_pad != batch or in_pad != in_f:
                xp = jnp.pad(x, ((0, rows_pad - batch), (0, in_pad - in_f)))
            out_rows = rows_pad
        else:
            xp = x if in_pad == in_f else jnp.pad(x, ((0, 0), (0, in_pad - in_f)))
            out_rows = batch

        kernel = functools.partial(
            _mlp_kernel,
            layer_meta=tuple(kernel_meta),
            leaky_slope=self.leaky_slope,
            softmax_dim=self.softmax_dim,
            logical_batch=batch,
        )

        vmem_limit = wb_mult * weight_bytes + tile_bytes(tm) + (4 << 20)
        vmem_limit = max(vmem_limit, 32 << 20)
        vmem_limit = min(vmem_limit, int(vmem_cap * 0.9))

        flat_wb = [a for wb in self.padded_params for a in wb]

        def build_call(use_single_buffer):
            in_specs = [pl.BlockSpec((tm, in_pad), lambda i: (i, 0))]
            for wp, bp in self.padded_params:
                in_specs.append(_resident_spec(wp.shape, use_single_buffer))
                in_specs.append(_resident_spec(bp.shape, use_single_buffer))
            return pl.pallas_call(
                kernel,
                out_shape=jax.ShapeDtypeStruct((out_rows, out_pad_last), out_dtype),
                grid=(grid_m,),
                in_specs=in_specs,
                out_specs=pl.BlockSpec((tm, out_pad_last), lambda i: (i, 0)),
                compiler_params=pltpu.CompilerParams(
                    dimension_semantics=("parallel",),
                    vmem_limit_bytes=int(vmem_limit)),
            )

        try:
            out_padded = build_call(single_buffer_weights)(xp, *flat_wb)
        except Exception:
            # Fallback for JAX versions without single-buffered pipeline_mode.
            out_padded = build_call(False)(xp, *flat_wb)

        out = out_padded[:batch, :self.output_size]
        if apply_final_softmax0:
            out = jax.nn.softmax(out, axis=0)  # exact batch-axis softmax, 2nd pass
        return out


if __name__ == "__main__":
    key = jax.random.PRNGKey(0)
    key, xk, pk, pk2, pk3 = jax.random.split(key, 5)

    batch = 8
    input_size = 32
    hidden_size = [64, 48]   # Perceptron expects hidden_size to be a list
    output_size = 16

    x = jax.random.normal(xk, (batch, input_size), dtype=jnp.float32)

    def reference(model, x):
        h = x
        for (w, b), (act, _) in zip(model.params, model.layer_meta):
            h = h @ w.T + b
            if act == "relu":
                h = jnp.maximum(h, 0.0)
            elif act == "leaky_relu":
                h = jnp.where(h >= 0.0, h, model.leaky_slope * h)
            elif act == "sigmoid":
                h = jax.nn.sigmoid(h)
            elif act == "tanh":
                h = jnp.tanh(h)
            elif act == "softmax":
                h = jax.nn.softmax(h, axis=model.softmax_dim)
        return h

    # --- model 1: relu hidden, identity output -------------------------------
    model = PerceptronPallas(input_size, hidden_size, output_size,
                             hidden_activation="relu", output_activation="none",
                             key=pk)
    out = jax.block_until_ready(model(x))
    ref = reference(model, x)
    assert out.shape == (batch, output_size)
    assert jnp.allclose(out, ref, atol=1e-3, rtol=1e-3)

    # --- model 2: sigmoid hidden + softmax(dim=0) output, odd widths ---------
    model2 = PerceptronPallas(input_size, [40], output_size,
                              hidden_activation="sigmoid",
                              output_activation="softmax",
                              softmax_dim=0, key=pk2)
    out2 = jax.block_until_ready(model2(x))
    ref2 = reference(model2, x)
    assert out2.shape == (batch, output_size)
    assert jnp.allclose(out2, ref2, atol=1e-3, rtol=1e-3)

    # --- model 3: tanh hidden + softmax over features (in-kernel, lane-masked)
    model3 = PerceptronPallas(input_size, [24], output_size,
                              hidden_activation="tanh",
                              output_activation="softmax",
                              softmax_dim=1, key=pk3)
    out3 = jax.block_until_ready(model3(x))
    ref3 = reference(model3, x)
    assert out3.shape == (batch, output_size)
    # approx EUP reciprocal in the in-kernel softmax -> slightly looser tolerance
    assert jnp.allclose(out3, ref3, atol=5e-3, rtol=5e-3)

    print("KERNEL_OK")
</pallas_src>

<mosaic_0001>
module attributes {stable_mosaic.version = 11 : i64} {
  func.func @_mlp_kernel(%arg0: i32, %arg1: memref<8x128xf32, #tpu.memory_space<vmem>>, %arg2: memref<128x128xf32, #tpu.memory_space<vmem>>, %arg3: memref<1x128xf32, #tpu.memory_space<vmem>>, %arg4: memref<128x128xf32, #tpu.memory_space<vmem>>, %arg5: memref<1x128xf32, #tpu.memory_space<vmem>>, %arg6: memref<128x128xf32, #tpu.memory_space<vmem>>, %arg7: memref<1x128xf32, #tpu.memory_space<vmem>>, %arg8: memref<8x128xf32, #tpu.memory_space<vmem>>) attributes {dimension_semantics = [#tpu.dimension_semantics<parallel>], iteration_bounds = array<i64: 1>, scalar_prefetch = 0 : i64, scratch_operands = 0 : i64, tpu.core_type = #tpu.core_type<tc>, window_params = [{transform_indices = @transform_0, window_bounds = array<i64: 8, 128>}, {pipeline_mode = #tpu.pipeline_mode<synchronous>, transform_indices = @transform_1, window_bounds = array<i64: 128, 128>}, {pipeline_mode = #tpu.pipeline_mode<synchronous>, transform_indices = @transform_2, window_bounds = array<i64: 1, 128>}, {pipeline_mode = #tpu.pipeline_mode<synchronous>, transform_indices = @transform_3, window_bounds = array<i64: 128, 128>}, {pipeline_mode = #tpu.pipeline_mode<synchronous>, transform_indices = @transform_4, window_bounds = array<i64: 1, 128>}, {pipeline_mode = #tpu.pipeline_mode<synchronous>, transform_indices = @transform_5, window_bounds = array<i64: 128, 128>}, {pipeline_mode = #tpu.pipeline_mode<synchronous>, transform_indices = @transform_6, window_bounds = array<i64: 1, 128>}, {transform_indices = @transform_7, window_bounds = array<i64: 8, 128>}]} {
    %c0 = arith.constant 0 : index
    %c0_0 = arith.constant 0 : index
    %0 = vector.load %arg1[%c0, %c0_0] : memref<8x128xf32, #tpu.memory_space<vmem>>, vector<8x128xf32>
    %c0_1 = arith.constant 0 : index
    %c0_2 = arith.constant 0 : index
    %1 = vector.load %arg2[%c0_1, %c0_2] : memref<128x128xf32, #tpu.memory_space<vmem>>, vector<128x128xf32>
    %cst = arith.constant dense<0.000000e+00> : vector<8x128xf32>
    %2 = tpu.matmul %0, %1, %cst {dimension_numbers = #tpu.dot_dimension_numbers<[1], [0], [0], [1], [0, 0, 1, 1], [], []>} : vector<8x128xf32>, vector<128x128xf32>, vector<8x128xf32> -> vector<8x128xf32>
    %c0_3 = arith.constant 0 : index
    %c0_4 = arith.constant 0 : index
    %3 = vector.load %arg3[%c0_3, %c0_4] : memref<1x128xf32, #tpu.memory_space<vmem>>, vector<1x128xf32>
    %4 = vector.broadcast %3 : vector<1x128xf32> to vector<8x128xf32>
    %5 = arith.addf %2, %4 : vector<8x128xf32>
    %cst_5 = arith.constant 0.000000e+00 : f32
    %6 = vector.broadcast %cst_5 : f32 to vector<8x128xf32>
    %7 = arith.maximumf %5, %6 : vector<8x128xf32>
    %c0_6 = arith.constant 0 : index
    %c0_7 = arith.constant 0 : index
    %8 = vector.load %arg4[%c0_6, %c0_7] : memref<128x128xf32, #tpu.memory_space<vmem>>, vector<128x128xf32>
    %cst_8 = arith.constant dense<0.000000e+00> : vector<8x128xf32>
    %9 = tpu.matmul %7, %8, %cst_8 {dimension_numbers = #tpu.dot_dimension_numbers<[1], [0], [0], [1], [0, 0, 1, 1], [], []>} : vector<8x128xf32>, vector<128x128xf32>, vector<8x128xf32> -> vector<8x128xf32>
    %c0_9 = arith.constant 0 : index
    %c0_10 = arith.constant 0 : index
    %10 = vector.load %arg5[%c0_9, %c0_10] : memref<1x128xf32, #tpu.memory_space<vmem>>, vector<1x128xf32>
    %11 = vector.broadcast %10 : vector<1x128xf32> to vector<8x128xf32>
    %12 = arith.addf %9, %11 : vector<8x128xf32>
    %cst_11 = arith.constant 0.000000e+00 : f32
    %13 = vector.broadcast %cst_11 : f32 to vector<8x128xf32>
    %14 = arith.maximumf %12, %13 : vector<8x128xf32>
    %c0_12 = arith.constant 0 : index
    %c0_13 = arith.constant 0 : index
    %15 = vector.load %arg6[%c0_12, %c0_13] : memref<128x128xf32, #tpu.memory_space<vmem>>, vector<128x128xf32>
    %cst_14 = arith.constant dense<0.000000e+00> : vector<8x128xf32>
    %16 = tpu.matmul %14, %15, %cst_14 {dimension_numbers = #tpu.dot_dimension_numbers<[1], [0], [0], [1], [0, 0, 1, 1], [], []>} : vector<8x128xf32>, vector<128x128xf32>, vector<8x128xf32> -> vector<8x128xf32>
    %c0_15 = arith.constant 0 : index
    %c0_16 = arith.constant 0 : index
    %17 = vector.load %arg7[%c0_15, %c0_16] : memref<1x128xf32, #tpu.memory_space<vmem>>, vector<1x128xf32>
    %18 = vector.broadcast %17 : vector<1x128xf32> to vector<8x128xf32>
    %19 = arith.addf %16, %18 : vector<8x128xf32>
    %c0_17 = arith.constant 0 : index
    %c0_18 = arith.constant 0 : index
    %20 = vector.load %arg8[%c0_17, %c0_18] : memref<8x128xf32, #tpu.memory_space<vmem>>, vector<8x128xf32>
    tpu.vector_store %arg8[%c0_17, %c0_18], %19 {strides = array<i32>} : memref<8x128xf32, #tpu.memory_space<vmem>>, vector<8x128xf32>,
    return
  }
  func.func @transform_0(%arg0: i32) -> (i32, i32) {
    %c0_i32 = arith.constant 0 : i32
    %c0_i32_0 = arith.constant 0 : i32
    return %arg0, %c0_i32 : i32, i32
  }
  func.func @transform_1(%arg0: i32) -> (i32, i32) {
    %c0_i32 = arith.constant 0 : i32
    %c0_i32_0 = arith.constant 0 : i32
    %c0_i32_1 = arith.constant 0 : i32
    return %c0_i32, %c0_i32_0 : i32, i32
  }
  func.func @transform_2(%arg0: i32) -> (i32, i32) {
    %c0_i32 = arith.constant 0 : i32
    %c0_i32_0 = arith.constant 0 : i32
    %c0_i32_1 = arith.constant 0 : i32
    return %c0_i32, %c0_i32_0 : i32, i32
  }
  func.func @transform_3(%arg0: i32) -> (i32, i32) {
    %c0_i32 = arith.constant 0 : i32
    %c0_i32_0 = arith.constant 0 : i32
    %c0_i32_1 = arith.constant 0 : i32
    return %c0_i32, %c0_i32_0 : i32, i32
  }
  func.func @transform_4(%arg0: i32) -> (i32, i32) {
    %c0_i32 = arith.constant 0 : i32
    %c0_i32_0 = arith.constant 0 : i32
    %c0_i32_1 = arith.constant 0 : i32
    return %c0_i32, %c0_i32_0 : i32, i32
  }
  func.func @transform_5(%arg0: i32) -> (i32, i32) {
    %c0_i32 = arith.constant 0 : i32
    %c0_i32_0 = arith.constant 0 : i32
    %c0_i32_1 = arith.constant 0 : i32
    return %c0_i32, %c0_i32_0 : i32, i32
  }
  func.func @transform_6(%arg0: i32) -> (i32, i32) {
    %c0_i32 = arith.constant 0 : i32
    %c0_i32_0 = arith.constant 0 : i32
    %c0_i32_1 = arith.constant 0 : i32
    return %c0_i32, %c0_i32_0 : i32, i32
  }
  func.func @transform_7(%arg0: i32) -> (i32, i32) {
    %c0_i32 = arith.constant 0 : i32
    %c0_i32_0 = arith.constant 0 : i32
    return %arg0, %c0_i32 : i32, i32
  }
}

module attributes {stable_mosaic.version = 11 : i64} {
  func.func @_mlp_kernel(%arg0: i32, %arg1: memref<8x128xf32, #tpu.memory_space<vmem>>, %arg2: memref<128x128xf32, #tpu.memory_space<vmem>>, %arg3: memref<1x128xf32, #tpu.memory_space<vmem>>, %arg4: memref<128x128xf32, #tpu.memory_space<vmem>>, %arg5: memref<1x128xf32, #tpu.memory_space<vmem>>, %arg6: memref<128x128xf32, #tpu.memory_space<vmem>>, %arg7: memref<1x128xf32, #tpu.memory_space<vmem>>, %arg8: memref<8x128xf32, #tpu.memory_space<vmem>>) attributes {dimension_semantics = [#tpu.dimension_semantics<parallel>], iteration_bounds = array<i64: 1>, scalar_prefetch = 0 : i64, scratch_operands = 0 : i64, tpu.core_type = #tpu.core_type<tc>, window_params = [{transform_indices = @transform_0, window_bounds = array<i64: 8, 128>}, {pipeline_mode = #tpu.pipeline_mode<synchronous>, transform_indices = @transform_1, window_bounds = array<i64: 128, 128>}, {pipeline_mode = #tpu.pipeline_mode<synchronous>, transform_indices = @transform_2, window_bounds = array<i64: 1, 128>}, {pipeline_mode = #tpu.pipeline_mode<synchronous>, transform_indices = @transform_3, window_bounds = array<i64: 128, 128>}, {pipeline_mode = #tpu.pipeline_mode<synchronous>, transform_indices = @transform_4, window_bounds = array<i64: 1, 128>}, {pipeline_mode = #tpu.pipeline_mode<synchronous>, transform_indices = @transform_5, window_bounds = array<i64: 128, 128>}, {pipeline_mode = #tpu.pipeline_mode<synchronous>, transform_indices = @transform_6, window_bounds = array<i64: 1, 128>}, {transform_indices = @transform_7, window_bounds = array<i64: 8, 128>}]} {
    %c0 = arith.constant 0 : index
    %c0_0 = arith.constant 0 : index
    %0 = vector.load %arg1[%c0, %c0_0] : memref<8x128xf32, #tpu.memory_space<vmem>>, vector<8x128xf32>
    %c0_1 = arith.constant 0 : index
    %c0_2 = arith.constant 0 : index
    %1 = vector.load %arg2[%c0_1, %c0_2] : memref<128x128xf32, #tpu.memory_space<vmem>>, vector<128x128xf32>
    %cst = arith.constant dense<0.000000e+00> : vector<8x128xf32>
    %2 = tpu.matmul %0, %1, %cst {dimension_numbers = #tpu.dot_dimension_numbers<[1], [0], [0], [1], [0, 0, 1, 1], [], []>} : vector<8x128xf32>, vector<128x128xf32>, vector<8x128xf32> -> vector<8x128xf32>
    %c0_3 = arith.constant 0 : index
    %c0_4 = arith.constant 0 : index
    %3 = vector.load %arg3[%c0_3, %c0_4] : memref<1x128xf32, #tpu.memory_space<vmem>>, vector<1x128xf32>
    %4 = vector.broadcast %3 : vector<1x128xf32> to vector<8x128xf32>
    %5 = arith.addf %2, %4 : vector<8x128xf32>
    %cst_5 = arith.constant 0.000000e+00 : f32
    %6 = vector.broadcast %cst_5 : f32 to vector<8x128xf32>
    %7 = arith.maximumf %5, %6 : vector<8x128xf32>
    %c0_6 = arith.constant 0 : index
    %c0_7 = arith.constant 0 : index
    %8 = vector.load %arg4[%c0_6, %c0_7] : memref<128x128xf32, #tpu.memory_space<vmem>>, vector<128x128xf32>
    %cst_8 = arith.constant dense<0.000000e+00> : vector<8x128xf32>
    %9 = tpu.matmul %7, %8, %cst_8 {dimension_numbers = #tpu.dot_dimension_numbers<[1], [0], [0], [1], [0, 0, 1, 1], [], []>} : vector<8x128xf32>, vector<128x128xf32>, vector<8x128xf32> -> vector<8x128xf32>
    %c0_9 = arith.constant 0 : index
    %c0_10 = arith.constant 0 : index
    %10 = vector.load %arg5[%c0_9, %c0_10] : memref<1x128xf32, #tpu.memory_space<vmem>>, vector<1x128xf32>
    %11 = vector.broadcast %10 : vector<1x128xf32> to vector<8x128xf32>
    %12 = arith.addf %9, %11 : vector<8x128xf32>
    %cst_11 = arith.constant 0.000000e+00 : f32
    %13 = vector.broadcast %cst_11 : f32 to vector<8x128xf32>
    %14 = arith.maximumf %12, %13 : vector<8x128xf32>
    %c0_12 = arith.constant 0 : index
    %c0_13 = arith.constant 0 : index
    %15 = vector.load %arg6[%c0_12, %c0_13] : memref<128x128xf32, #tpu.memory_space<vmem>>, vector<128x128xf32>
    %cst_14 = arith.constant dense<0.000000e+00> : vector<8x128xf32>
    %16 = tpu.matmul %14, %15, %cst_14 {dimension_numbers = #tpu.dot_dimension_numbers<[1], [0], [0], [1], [0, 0, 1, 1], [], []>} : vector<8x128xf32>, vector<128x128xf32>, vector<8x128xf32> -> vector<8x128xf32>
    %c0_15 = arith.constant 0 : index
    %c0_16 = arith.constant 0 : index
    %17 = vector.load %arg7[%c0_15, %c0_16] : memref<1x128xf32, #tpu.memory_space<vmem>>, vector<1x128xf32>
    %18 = vector.broadcast %17 : vector<1x128xf32> to vector<8x128xf32>
    %19 = arith.addf %16, %18 : vector<8x128xf32>
    %c0_17 = arith.constant 0 : index
    %c0_18 = arith.constant 0 : index
    %20 = vector.load %arg8[%c0_17, %c0_18] : memref<8x128xf32, #tpu.memory_space<vmem>>, vector<8x128xf32>
    tpu.vector_store %arg8[%c0_17, %c0_18], %19 {strides = array<i32>} : memref<8x128xf32, #tpu.memory_space<vmem>>, vector<8x128xf32>,
    return
  }
  func.func @transform_0(%arg0: i32) -> (i32, i32) {
    %c0_i32 = arith.constant 0 : i32
    %c0_i32_0 = arith.constant 0 : i32
    return %arg0, %c0_i32 : i32, i32
  }
  func.func @transform_1(%arg0: i32) -> (i32, i32) {
    %c0_i32 = arith.constant 0 : i32
    %c0_i32_0 = arith.constant 0 : i32
    %c0_i32_1 = arith.constant 0 : i32
    return %c0_i32, %c0_i32_0 : i32, i32
  }
  func.func @transform_2(%arg0: i32) -> (i32, i32) {
    %c0_i32 = arith.constant 0 : i32
    %c0_i32_0 = arith.constant 0 : i32
    %c0_i32_1 = arith.constant 0 : i32
    return %c0_i32, %c0_i32_0 : i32, i32
  }
  func.func @transform_3(%arg0: i32) -> (i32, i32) {
    %c0_i32 = arith.constant 0 : i32
    %c0_i32_0 = arith.constant 0 : i32
    %c0_i32_1 = arith.constant 0 : i32
    return %c0_i32, %c0_i32_0 : i32, i32
  }
  func.func @transform_4(%arg0: i32) -> (i32, i32) {
    %c0_i32 = arith.constant 0 : i32
    %c0_i32_0 = arith.constant 0 : i32
    %c0_i32_1 = arith.constant 0 : i32
    return %c0_i32, %c0_i32_0 : i32, i32
  }
  func.func @transform_5(%arg0: i32) -> (i32, i32) {
    %c0_i32 = arith.constant 0 : i32
    %c0_i32_0 = arith.constant 0 : i32
    %c0_i32_1 = arith.constant 0 : i32
    return %c0_i32, %c0_i32_0 : i32, i32
  }
  func.func @transform_6(%arg0: i32) -> (i32, i32) {
    %c0_i32 = arith.constant 0 : i32
    %c0_i32_0 = arith.constant 0 : i32
    %c0_i32_1 = arith.constant 0 : i32
    return %c0_i32, %c0_i32_0 : i32, i32
  }
  func.func @transform_7(%arg0: i32) -> (i32, i32) {
    %c0_i32 = arith.constant 0 : i32
    %c0_i32_0 = arith.constant 0 : i32
    return %arg0, %c0_i32 : i32, i32
  }
}

</mosaic_0001>

<llo_original>
// kernel: tpu_custom_call.1
$region0: #{tpu_custom_call.1}
  #allocation0 [shape = 'u32[]', space=smem, size = 0x4, offset = 0x4, fixed_abs, tag = 'smem constant byte address 0x4 - core index']
  #allocation1 [shape = 'u32[72,128]{1,0:T(1,128)}', space=vmem, size = 0x9000, scoped, tag = 'internal scratch']
  %s0 = inlined_call_operand.hbm [shape: f32[8,128], index: 0, kind: input, shape index: {}]
  %s1 = inlined_call_operand.hbm [shape: f32[128,128], index: 1, kind: input, shape index: {}]
  %s2 = inlined_call_operand.vmem [shape: f32[1,128], index: 2, kind: input, shape index: {}]
  %s3 = inlined_call_operand.hbm [shape: f32[128,128], index: 3, kind: input, shape index: {}]
  %s4 = inlined_call_operand.vmem [shape: f32[1,128], index: 4, kind: input, shape index: {}]
  %s5 = inlined_call_operand.hbm [shape: f32[128,128], index: 5, kind: input, shape index: {}]
  %s6 = inlined_call_operand.vmem [shape: f32[1,128], index: 6, kind: input, shape index: {}]
  %s7 = inlined_call_operand.hbm [shape: f32[8,128], index: 7, kind: output, shape index: {}]
  %s8 = sld [smem:[#allocation0]]
  $region54: #{tpu_custom_call.1} parent=0
    _
  %s10 = ssub.s32 1, %s8
  %s11 = scalar_select 0, %s10, %s8
  $region1: #{tpu_custom_call.1} parent=0
    #allocation2 [shape = 'u8[4096]{0}', space=vmem, size = 0x1000, scoped, tag = 'input window, operand 0, single buffered']
    #allocation3 [shape = 's32[1]{0}', space=sflag, size = 0x4, scoped, tag = 'scoped memory for tpu_custom_call.1']
    #allocation4 [shape = 's32[1]{0}', space=sflag, size = 0x4, scoped, tag = 'scoped memory for tpu_custom_call.1']
    #allocation5 [shape = 'u8[65536]{0}', space=vmem, size = 0x10000, scoped, tag = 'input window, operand 1, single buffered']
    #allocation6 [shape = 's32[1]{0}', space=sflag, size = 0x4, scoped, tag = 'scoped memory for tpu_custom_call.1']
    #allocation7 [shape = 'u8[65536]{0}', space=vmem, size = 0x10000, scoped, tag = 'input window, operand 3, single buffered']
    #allocation8 [shape = 'u8[65536]{0}', space=vmem, size = 0x10000, scoped, tag = 'input window, operand 5, single buffered']
    #allocation9 [shape = 's32[1]{0}', space=sflag, size = 0x4, scoped, tag = 'scoped memory for tpu_custom_call.1']
    #allocation10 [shape = 'u8[4096]{0}', space=vmem, size = 0x1000, scoped, tag = 'output window, operand 0, single buffered']
    %12 = vsyncpa [#allocation3], 0
    %13 = vsyncpa [#allocation6], 0
    %14 = vsyncpa [#allocation9], 0
    %15 = vsyncpa [#allocation4], 0
    // Predicated region
    $region2: #{tpu_custom_call.1} parent=1 // pred_check
      _
    $region3: #{tpu_custom_call.1} parent=1 // pred_check_branch
      %17 = sbr.rel (0) target = $region5
    $region4: #{tpu_custom_call.1} parent=1 // pred_region
      %19 = vsyncadd [#allocation3], 0
      %s21 = sshll.u32 %s0, 4
      %s22 = int_to_ptr.hbm [resolvable:$true] %s21
      %s23 = sshll.u32 [#allocation2], 4
      %s24 = int_to_ptr.vmem [resolvable:$true] %s23
      %26 = dma.hbm_to_vmem [thread:$0]  %s22, 128, %s24, [#allocation3]
    $region5: #{tpu_custom_call.1} parent=1 // pred_fallthru
      _
    // Predicated region
    $region6: #{tpu_custom_call.1} parent=1 // pred_check
      _
    $region7: #{tpu_custom_call.1} parent=1 // pred_check_branch
      %28 = sbr.rel (0) target = $region9
    $region8: #{tpu_custom_call.1} parent=1 // pred_region
      %30 = vsyncadd [#allocation6], 0
      %s31 = sshll.u32 %s1, 4
      %s32 = int_to_ptr.hbm [resolvable:$true] %s31
      %s33 = sshll.u32 [#allocation5], 4
      %s34 = int_to_ptr.vmem [resolvable:$true] %s33
      %39 = dma.hbm_to_vmem [thread:$0]  %s32, 2048, %s34, [#allocation6], 128, 128, 8
    $region9: #{tpu_custom_call.1} parent=1 // pred_fallthru
      _
    // Predicated region
    $region10: #{tpu_custom_call.1} parent=1 // pred_check
      _
    $region11: #{tpu_custom_call.1} parent=1 // pred_check_branch
      %41 = sbr.rel (0) target = $region13
    $region12: #{tpu_custom_call.1} parent=1 // pred_region
      _
    $region13: #{tpu_custom_call.1} parent=1 // pred_fallthru
      _
    // Predicated region
    $region14: #{tpu_custom_call.1} parent=1 // pred_check
      _
    $region15: #{tpu_custom_call.1} parent=1 // pred_check_branch
      %43 = sbr.rel (0) target = $region17
    $region16: #{tpu_custom_call.1} parent=1 // pred_region
      %45 = vsyncadd [#allocation6], 0
      %s46 = sshll.u32 %s3, 4
      %s47 = int_to_ptr.hbm [resolvable:$true] %s46
      %s48 = sshll.u32 [#allocation7], 4
      %s49 = int_to_ptr.vmem [resolvable:$true] %s48
      %54 = dma.hbm_to_vmem [thread:$0]  %s47, 2048, %s49, [#allocation6], 128, 128, 8
    $region17: #{tpu_custom_call.1} parent=1 // pred_fallthru
      _
    // Predicated region
    $region18: #{tpu_custom_call.1} parent=1 // pred_check
      _
    $region19: #{tpu_custom_call.1} parent=1 // pred_check_branch
      %56 = sbr.rel (0) target = $region21
    $region20: #{tpu_custom_call.1} parent=1 // pred_region
      _
    $region21: #{tpu_custom_call.1} parent=1 // pred_fallthru
      _
    // Predicated region
    $region22: #{tpu_custom_call.1} parent=1 // pred_check
      _
    $region23: #{tpu_custom_call.1} parent=1 // pred_check_branch
      %58 = sbr.rel (0) target = $region25
    $region24: #{tpu_custom_call.1} parent=1 // pred_region
      %60 = vsyncadd [#allocation9], 0
      %s61 = sshll.u32 %s5, 4
      %s62 = int_to_ptr.hbm [resolvable:$true] %s61
      %s63 = sshll.u32 [#allocation8], 4
      %s64 = int_to_ptr.vmem [resolvable:$true] %s63
      %69 = dma.hbm_to_vmem [thread:$0]  %s62, 2048, %s64, [#allocation9], 128, 128, 8
    $region25: #{tpu_custom_call.1} parent=1 // pred_fallthru
      _
    // Predicated region
    $region26: #{tpu_custom_call.1} parent=1 // pred_check
      _
    $region27: #{tpu_custom_call.1} parent=1 // pred_check_branch
      %71 = sbr.rel (0) target = $region29
    $region28: #{tpu_custom_call.1} parent=1 // pred_region
      _
    $region29: #{tpu_custom_call.1} parent=1 // pred_fallthru
      _
    // Predicated region
    $region30: #{tpu_custom_call.1} parent=1 // pred_check
      _
    $region31: #{tpu_custom_call.1} parent=1 // pred_check_branch
      %73 = sbr.rel (0) target = $region33
    $region32: #{tpu_custom_call.1} parent=1 // pred_region
      %75 = dma.done [#allocation3], 128
    $region33: #{tpu_custom_call.1} parent=1 // pred_fallthru
      _
    // Predicated region
    $region34: #{tpu_custom_call.1} parent=1 // pred_check
      _
    $region35: #{tpu_custom_call.1} parent=1 // pred_check_branch
      %77 = sbr.rel (0) target = $region37
    $region36: #{tpu_custom_call.1} parent=1 // pred_region
      %79 = dma.done [#allocation6], 2048
    $region37: #{tpu_custom_call.1} parent=1 // pred_fallthru
      _
    // Predicated region
    $region38: #{tpu_custom_call.1} parent=1 // pred_check
      _
    $region39: #{tpu_custom_call.1} parent=1 // pred_check_branch
      %81 = sbr.rel (0) target = $region41
    $region40: #{tpu_custom_call.1} parent=1 // pred_region
      %83 = dma.done [#allocation6], 2048
    $region41: #{tpu_custom_call.1} parent=1 // pred_fallthru
      _
    // Predicated region
    $region42: #{tpu_custom_call.1} parent=1 // pred_check
      _
    $region43: #{tpu_custom_call.1} parent=1 // pred_check_branch
      %85 = sbr.rel (0) target = $region45
    $region44: #{tpu_custom_call.1} parent=1 // pred_region
      %87 = dma.done [#allocation9], 2048
    $region45: #{tpu_custom_call.1} parent=1 // pred_fallthru
      _
    %v88 = vld [vmem:[#allocation2] sm:$0xff]
    %v89 = vld [vmem:[#allocation5] sm:$0xff]
    %v90 = vld [vmem:[#allocation5 + $0x8] sm:$0xff]
    %v91 = vld [vmem:[#allocation5 + $0x10] sm:$0xff]
    %v92 = vld [vmem:[#allocation5 + $0x18] sm:$0xff]
    %v93 = vld [vmem:[#allocation5 + $0x20] sm:$0xff]
    %v94 = vld [vmem:[#allocation5 + $0x28] sm:$0xff]
    %v95 = vld [vmem:[#allocation5 + $0x30] sm:$0xff]
    %v96 = vld [vmem:[#allocation5 + $0x38] sm:$0xff]
    %v97 = vld [vmem:[#allocation5 + $0x40] sm:$0xff]
    %v98 = vld [vmem:[#allocation5 + $0x48] sm:$0xff]
    %v99 = vld [vmem:[#allocation5 + $0x50] sm:$0xff]
    %v100 = vld [vmem:[#allocation5 + $0x58] sm:$0xff]
    %v101 = vld [vmem:[#allocation5 + $0x60] sm:$0xff]
    %v102 = vld [vmem:[#allocation5 + $0x68] sm:$0xff]
    %v103 = vld [vmem:[#allocation5 + $0x70] sm:$0xff]
    %v104 = vld [vmem:[#allocation5 + $0x78] sm:$0xff]
    %v105 = vld [vmem:[%s2] sm:$0x1]
    %v107 = vperm.slane %v105, 0
    %109 = vmatpush.msra.mxu0 %v104
    %110 = vmatpush.msra.mxu0 %v103
    %111 = vmatpush.msra.mxu0 %v102
    %112 = vmatpush.msra.mxu0 %v101
    %113 = vmatpush.msra.mxu0 %v100
    %114 = vmatpush.msra.mxu0 %v99
    %115 = vmatpush.msra.mxu0 %v98
    %116 = vmatpush.msra.mxu0 %v97
    %117 = vmatpush.msra.mxu0 %v96
    %118 = vmatpush.msra.mxu0 %v95
    %119 = vmatpush.msra.mxu0 %v94
    %120 = vmatpush.msra.mxu0 %v93
    %121 = vmatpush.msra.mxu0 %v92
    %122 = vmatpush.msra.mxu0 %v91
    %123 = vmatpush.msra.mxu0 %v90
    %124 = vmatpush.msra.mxu0 %v89
    %125 = vmatmul.f32.gmra.mxu0 %v88
    %v126 = vpop.f32.mrf.mxu0
    %v127 = vadd.f32 %v107, %v126
    %128 = vdwg.mxu0
    %v129 = vmax.f32 %v127, 0.0
    %v130 = vld [vmem:[#allocation7] sm:$0xff]
    %v131 = vld [vmem:[#allocation7 + $0x8] sm:$0xff]
    %v132 = vld [vmem:[#allocation7 + $0x10] sm:$0xff]
    %v133 = vld [vmem:[#allocation7 + $0x18] sm:$0xff]
    %v134 = vld [vmem:[#allocation7 + $0x20] sm:$0xff]
    %v135 = vld [vmem:[#allocation7 + $0x28] sm:$0xff]
    %v136 = vld [vmem:[#allocation7 + $0x30] sm:$0xff]
    %v137 = vld [vmem:[#allocation7 + $0x38] sm:$0xff]
    %v138 = vld [vmem:[#allocation7 + $0x40] sm:$0xff]
    %v139 = vld [vmem:[#allocation7 + $0x48] sm:$0xff]
    %v140 = vld [vmem:[#allocation7 + $0x50] sm:$0xff]
    %v141 = vld [vmem:[#allocation7 + $0x58] sm:$0xff]
    %v142 = vld [vmem:[#allocation7 + $0x60] sm:$0xff]
    %v143 = vld [vmem:[#allocation7 + $0x68] sm:$0xff]
    %v144 = vld [vmem:[#allocation7 + $0x70] sm:$0xff]
    %v145 = vld [vmem:[#allocation7 + $0x78] sm:$0xff]
    %v146 = vld [vmem:[%s4] sm:$0x1]
    %v148 = vperm.slane %v146, 0
    %150 = vmatpush.msra.mxu0 %v145
    %151 = vmatpush.msra.mxu0 %v144
    %152 = vmatpush.msra.mxu0 %v143
    %153 = vmatpush.msra.mxu0 %v142
    %154 = vmatpush.msra.mxu0 %v141
    %155 = vmatpush.msra.mxu0 %v140
    %156 = vmatpush.msra.mxu0 %v139
    %157 = vmatpush.msra.mxu0 %v138
    %158 = vmatpush.msra.mxu0 %v137
    %159 = vmatpush.msra.mxu0 %v136
    %160 = vmatpush.msra.mxu0 %v135
    %161 = vmatpush.msra.mxu0 %v134
    %162 = vmatpush.msra.mxu0 %v133
    %163 = vmatpush.msra.mxu0 %v132
    %164 = vmatpush.msra.mxu0 %v131
    %165 = vmatpush.msra.mxu0 %v130
    %166 = vmatmul.f32.gmra.mxu0 %v129
    %v167 = vpop.f32.mrf.mxu0
    %v168 = vadd.f32 %v148, %v167
    %169 = vdwg.mxu0
    %v170 = vmax.f32 %v168, 0.0
    %v171 = vld [vmem:[#allocation8] sm:$0xff]
    %v172 = vld [vmem:[#allocation8 + $0x8] sm:$0xff]
    %v173 = vld [vmem:[#allocation8 + $0x10] sm:$0xff]
    %v174 = vld [vmem:[#allocation8 + $0x18] sm:$0xff]
    %v175 = vld [vmem:[#allocation8 + $0x20] sm:$0xff]
    %v176 = vld [vmem:[#allocation8 + $0x28] sm:$0xff]
    %v177 = vld [vmem:[#allocation8 + $0x30] sm:$0xff]
    %v178 = vld [vmem:[#allocation8 + $0x38] sm:$0xff]
    %v179 = vld [vmem:[#allocation8 + $0x40] sm:$0xff]
    %v180 = vld [vmem:[#allocation8 + $0x48] sm:$0xff]
    %v181 = vld [vmem:[#allocation8 + $0x50] sm:$0xff]
    %v182 = vld [vmem:[#allocation8 + $0x58] sm:$0xff]
    %v183 = vld [vmem:[#allocation8 + $0x60] sm:$0xff]
    %v184 = vld [vmem:[#allocation8 + $0x68] sm:$0xff]
    %v185 = vld [vmem:[#allocation8 + $0x70] sm:$0xff]
    %v186 = vld [vmem:[#allocation8 + $0x78] sm:$0xff]
    %v187 = vld [vmem:[%s6] sm:$0x1]
    %v189 = vperm.slane %v187, 0
    %191 = vmatpush.msra.mxu0 %v186
    %192 = vmatpush.msra.mxu0 %v185
    %193 = vmatpush.msra.mxu0 %v184
    %194 = vmatpush.msra.mxu0 %v183
    %195 = vmatpush.msra.mxu0 %v182
    %196 = vmatpush.msra.mxu0 %v181
    %197 = vmatpush.msra.mxu0 %v180
    %198 = vmatpush.msra.mxu0 %v179
    %199 = vmatpush.msra.mxu0 %v178
    %200 = vmatpush.msra.mxu0 %v177
    %201 = vmatpush.msra.mxu0 %v176
    %202 = vmatpush.msra.mxu0 %v175
    %203 = vmatpush.msra.mxu0 %v174
    %204 = vmatpush.msra.mxu0 %v173
    %205 = vmatpush.msra.mxu0 %v172
    %206 = vmatpush.msra.mxu0 %v171
    %207 = vmatmul.f32.gmra.mxu0 %v170
    %v208 = vpop.f32.mrf.mxu0
    %v209 = vadd.f32 %v189, %v208
    %210 = vdwg.mxu0
    %211 = vst [vmem:[#allocation10] sm:$0xff] %v209
    // Predicated region
    $region46: #{tpu_custom_call.1} parent=1 // pred_check
      _
    $region47: #{tpu_custom_call.1} parent=1 // pred_check_branch
      %213 = sbr.rel (0) target = $region49
    $region48: #{tpu_custom_call.1} parent=1 // pred_region
      %215 = vsyncadd [#allocation4], 0
      %s217 = sshll.u32 [#allocation10], 4
      %s218 = int_to_ptr.vmem [resolvable:$true] %s217
      %s219 = sshll.u32 %s7, 4
      %s220 = int_to_ptr.hbm [resolvable:$true] %s219
      %222 = dma.vmem_to_hbm [thread:$0]  %s218, 128, %s220, [#allocation4]
    $region49: #{tpu_custom_call.1} parent=1 // pred_fallthru
      _
    // Predicated region
    $region50: #{tpu_custom_call.1} parent=1 // pred_check
      _
    $region51: #{tpu_custom_call.1} parent=1 // pred_check_branch
      %224 = sbr.rel (0) target = $region53
    $region52: #{tpu_custom_call.1} parent=1 // pred_region
      %226 = dma.done [#allocation4], 128
    $region53: #{tpu_custom_call.1} parent=1 // pred_fallthru
      _
    %227 = vsyncpa [#allocation3], 1
    %228 = vsyncpa [#allocation6], 1
    %229 = vsyncpa [#allocation9], 1
    %230 = vsyncpa [#allocation4], 1

// kernel: tpu_custom_call.1
$region0: #{tpu_custom_call.1}
  #allocation0 [shape = 'u32[]', space=smem, size = 0x4, offset = 0x4, fixed_abs, tag = 'smem constant byte address 0x4 - core index']
  #allocation1 [shape = 'u32[72,128]{1,0:T(1,128)}', space=vmem, size = 0x9000, scoped, tag = 'internal scratch']
  %s0 = inlined_call_operand.hbm [shape: f32[8,128], index: 0, kind: input, shape index: {}]
  %s1 = inlined_call_operand.hbm [shape: f32[128,128], index: 1, kind: input, shape index: {}]
  %s2 = inlined_call_operand.vmem [shape: f32[1,128], index: 2, kind: input, shape index: {}]
  %s3 = inlined_call_operand.hbm [shape: f32[128,128], index: 3, kind: input, shape index: {}]
  %s4 = inlined_call_operand.vmem [shape: f32[1,128], index: 4, kind: input, shape index: {}]
  %s5 = inlined_call_operand.hbm [shape: f32[128,128], index: 5, kind: input, shape index: {}]
  %s6 = inlined_call_operand.vmem [shape: f32[1,128], index: 6, kind: input, shape index: {}]
  %s7 = inlined_call_operand.hbm [shape: f32[8,128], index: 7, kind: output, shape index: {}]
  %s8 = sld [smem:[#allocation0]]
  $region54: #{tpu_custom_call.1} parent=0
    _
  %s10 = ssub.s32 1, %s8
  %s11 = scalar_select 0, %s10, %s8
  $region1: #{tpu_custom_call.1} parent=0
    #allocation2 [shape = 'u8[4096]{0}', space=vmem, size = 0x1000, scoped, tag = 'input window, operand 0, single buffered']
    #allocation3 [shape = 's32[1]{0}', space=sflag, size = 0x4, scoped, tag = 'scoped memory for tpu_custom_call.1']
    #allocation4 [shape = 's32[1]{0}', space=sflag, size = 0x4, scoped, tag = 'scoped memory for tpu_custom_call.1']
    #allocation5 [shape = 'u8[65536]{0}', space=vmem, size = 0x10000, scoped, tag = 'input window, operand 1, single buffered']
    #allocation6 [shape = 's32[1]{0}', space=sflag, size = 0x4, scoped, tag = 'scoped memory for tpu_custom_call.1']
    #allocation7 [shape = 'u8[65536]{0}', space=vmem, size = 0x10000, scoped, tag = 'input window, operand 3, single buffered']
    #allocation8 [shape = 'u8[65536]{0}', space=vmem, size = 0x10000, scoped, tag = 'input window, operand 5, single buffered']
    #allocation9 [shape = 's32[1]{0}', space=sflag, size = 0x4, scoped, tag = 'scoped memory for tpu_custom_call.1']
    #allocation10 [shape = 'u8[4096]{0}', space=vmem, size = 0x1000, scoped, tag = 'output window, operand 0, single buffered']
    %12 = vsyncpa [#allocation3], 0
    %13 = vsyncpa [#allocation6], 0
    %14 = vsyncpa [#allocation9], 0
    %15 = vsyncpa [#allocation4], 0
    // Predicated region
    $region2: #{tpu_custom_call.1} parent=1 // pred_check
      _
    $region3: #{tpu_custom_call.1} parent=1 // pred_check_branch
      %17 = sbr.rel (0) target = $region5
    $region4: #{tpu_custom_call.1} parent=1 // pred_region
      %19 = vsyncadd [#allocation3], 0
      %s21 = sshll.u32 %s0, 4
      %s22 = int_to_ptr.hbm [resolvable:$true] %s21
      %s23 = sshll.u32 [#allocation2], 4
      %s24 = int_to_ptr.vmem [resolvable:$true] %s23
      %26 = dma.hbm_to_vmem [thread:$0]  %s22, 128, %s24, [#allocation3]
    $region5: #{tpu_custom_call.1} parent=1 // pred_fallthru
      _
    // Predicated region
    $region6: #{tpu_custom_call.1} parent=1 // pred_check
      _
    $region7: #{tpu_custom_call.1} parent=1 // pred_check_branch
      %28 = sbr.rel (0) target = $region9
    $region8: #{tpu_custom_call.1} parent=1 // pred_region
      %30 = vsyncadd [#allocation6], 0
      %s31 = sshll.u32 %s1, 4
      %s32 = int_to_ptr.hbm [resolvable:$true] %s31
      %s33 = sshll.u32 [#allocation5], 4
      %s34 = int_to_ptr.vmem [resolvable:$true] %s33
      %39 = dma.hbm_to_vmem [thread:$0]  %s32, 2048, %s34, [#allocation6], 128, 128, 8
    $region9: #{tpu_custom_call.1} parent=1 // pred_fallthru
      _
    // Predicated region
    $region10: #{tpu_custom_call.1} parent=1 // pred_check
      _
    $region11: #{tpu_custom_call.1} parent=1 // pred_check_branch
      %41 = sbr.rel (0) target = $region13
    $region12: #{tpu_custom_call.1} parent=1 // pred_region
      _
    $region13: #{tpu_custom_call.1} parent=1 // pred_fallthru
      _
    // Predicated region
    $region14: #{tpu_custom_call.1} parent=1 // pred_check
      _
    $region15: #{tpu_custom_call.1} parent=1 // pred_check_branch
      %43 = sbr.rel (0) target = $region17
    $region16: #{tpu_custom_call.1} parent=1 // pred_region
      %45 = vsyncadd [#allocation6], 0
      %s46 = sshll.u32 %s3, 4
      %s47 = int_to_ptr.hbm [resolvable:$true] %s46
      %s48 = sshll.u32 [#allocation7], 4
      %s49 = int_to_ptr.vmem [resolvable:$true] %s48
      %54 = dma.hbm_to_vmem [thread:$0]  %s47, 2048, %s49, [#allocation6], 128, 128, 8
    $region17: #{tpu_custom_call.1} parent=1 // pred_fallthru
      _
    // Predicated region
    $region18: #{tpu_custom_call.1} parent=1 // pred_check
      _
    $region19: #{tpu_custom_call.1} parent=1 // pred_check_branch
      %56 = sbr.rel (0) target = $region21
    $region20: #{tpu_custom_call.1} parent=1 // pred_region
      _
    $region21: #{tpu_custom_call.1} parent=1 // pred_fallthru
      _
    // Predicated region
    $region22: #{tpu_custom_call.1} parent=1 // pred_check
      _
    $region23: #{tpu_custom_call.1} parent=1 // pred_check_branch
      %58 = sbr.rel (0) target = $region25
    $region24: #{tpu_custom_call.1} parent=1 // pred_region
      %60 = vsyncadd [#allocation9], 0
      %s61 = sshll.u32 %s5, 4
      %s62 = int_to_ptr.hbm [resolvable:$true] %s61
      %s63 = sshll.u32 [#allocation8], 4
      %s64 = int_to_ptr.vmem [resolvable:$true] %s63
      %69 = dma.hbm_to_vmem [thread:$0]  %s62, 2048, %s64, [#allocation9], 128, 128, 8
    $region25: #{tpu_custom_call.1} parent=1 // pred_fallthru
      _
    // Predicated region
    $region26: #{tpu_custom_call.1} parent=1 // pred_check
      _
    $region27: #{tpu_custom_call.1} parent=1 // pred_check_branch
      %71 = sbr.rel (0) target = $region29
    $region28: #{tpu_custom_call.1} parent=1 // pred_region
      _
    $region29: #{tpu_custom_call.1} parent=1 // pred_fallthru
      _
    // Predicated region
    $region30: #{tpu_custom_call.1} parent=1 // pred_check
      _
    $region31: #{tpu_custom_call.1} parent=1 // pred_check_branch
      %73 = sbr.rel (0) target = $region33
    $region32: #{tpu_custom_call.1} parent=1 // pred_region
      %75 = dma.done [#allocation3], 128
    $region33: #{tpu_custom_call.1} parent=1 // pred_fallthru
      _
    // Predicated region
    $region34: #{tpu_custom_call.1} parent=1 // pred_check
      _
    $region35: #{tpu_custom_call.1} parent=1 // pred_check_branch
      %77 = sbr.rel (0) target = $region37
    $region36: #{tpu_custom_call.1} parent=1 // pred_region
      %79 = dma.done [#allocation6], 2048
    $region37: #{tpu_custom_call.1} parent=1 // pred_fallthru
      _
    // Predicated region
    $region38: #{tpu_custom_call.1} parent=1 // pred_check
      _
    $region39: #{tpu_custom_call.1} parent=1 // pred_check_branch
      %81 = sbr.rel (0) target = $region41
    $region40: #{tpu_custom_call.1} parent=1 // pred_region
      %83 = dma.done [#allocation6], 2048
    $region41: #{tpu_custom_call.1} parent=1 // pred_fallthru
      _
    // Predicated region
    $region42: #{tpu_custom_call.1} parent=1 // pred_check
      _
    $region43: #{tpu_custom_call.1} parent=1 // pred_check_branch
      %85 = sbr.rel (0) target = $region45
    $region44: #{tpu_custom_call.1} parent=1 // pred_region
      %87 = dma.done [#allocation9], 2048
    $region45: #{tpu_custom_call.1} parent=1 // pred_fallthru
      _
    %v88 = vld [vmem:[#allocation2] sm:$0xff]
    %v89 = vld [vmem:[#allocation5] sm:$0xff]
    %v90 = vld [vmem:[#allocation5 + $0x8] sm:$0xff]
    %v91 = vld [vmem:[#allocation5 + $0x10] sm:$0xff]
    %v92 = vld [vmem:[#allocation5 + $0x18] sm:$0xff]
    %v93 = vld [vmem:[#allocation5 + $0x20] sm:$0xff]
    %v94 = vld [vmem:[#allocation5 + $0x28] sm:$0xff]
    %v95 = vld [vmem:[#allocation5 + $0x30] sm:$0xff]
    %v96 = vld [vmem:[#allocation5 + $0x38] sm:$0xff]
    %v97 = vld [vmem:[#allocation5 + $0x40] sm:$0xff]
    %v98 = vld [vmem:[#allocation5 + $0x48] sm:$0xff]
    %v99 = vld [vmem:[#allocation5 + $0x50] sm:$0xff]
    %v100 = vld [vmem:[#allocation5 + $0x58] sm:$0xff]
    %v101 = vld [vmem:[#allocation5 + $0x60] sm:$0xff]
    %v102 = vld [vmem:[#allocation5 + $0x68] sm:$0xff]
    %v103 = vld [vmem:[#allocation5 + $0x70] sm:$0xff]
    %v104 = vld [vmem:[#allocation5 + $0x78] sm:$0xff]
    %v105 = vld [vmem:[%s2] sm:$0x1]
    %v107 = vperm.slane %v105, 0
    %109 = vmatpush.msra.mxu0 %v104
    %110 = vmatpush.msra.mxu0 %v103
    %111 = vmatpush.msra.mxu0 %v102
    %112 = vmatpush.msra.mxu0 %v101
    %113 = vmatpush.msra.mxu0 %v100
    %114 = vmatpush.msra.mxu0 %v99
    %115 = vmatpush.msra.mxu0 %v98
    %116 = vmatpush.msra.mxu0 %v97
    %117 = vmatpush.msra.mxu0 %v96
    %118 = vmatpush.msra.mxu0 %v95
    %119 = vmatpush.msra.mxu0 %v94
    %120 = vmatpush.msra.mxu0 %v93
    %121 = vmatpush.msra.mxu0 %v92
    %122 = vmatpush.msra.mxu0 %v91
    %123 = vmatpush.msra.mxu0 %v90
    %124 = vmatpush.msra.mxu0 %v89
    %125 = vmatmul.f32.gmra.mxu0 %v88
    %v126 = vpop.f32.mrf.mxu0
    %v127 = vadd.f32 %v107, %v126
    %128 = vdwg.mxu0
    %v129 = vmax.f32 %v127, 0.0
    %v130 = vld [vmem:[#allocation7] sm:$0xff]
    %v131 = vld [vmem:[#allocation7 + $0x8] sm:$0xff]
    %v132 = vld [vmem:[#allocation7 + $0x10] sm:$0xff]
    %v133 = vld [vmem:[#allocation7 + $0x18] sm:$0xff]
    %v134 = vld [vmem:[#allocation7 + $0x20] sm:$0xff]
    %v135 = vld [vmem:[#allocation7 + $0x28] sm:$0xff]
    %v136 = vld [vmem:[#allocation7 + $0x30] sm:$0xff]
    %v137 = vld [vmem:[#allocation7 + $0x38] sm:$0xff]
    %v138 = vld [vmem:[#allocation7 + $0x40] sm:$0xff]
    %v139 = vld [vmem:[#allocation7 + $0x48] sm:$0xff]
    %v140 = vld [vmem:[#allocation7 + $0x50] sm:$0xff]
    %v141 = vld [vmem:[#allocation7 + $0x58] sm:$0xff]
    %v142 = vld [vmem:[#allocation7 + $0x60] sm:$0xff]
    %v143 = vld [vmem:[#allocation7 + $0x68] sm:$0xff]
    %v144 = vld [vmem:[#allocation7 + $0x70] sm:$0xff]
    %v145 = vld [vmem:[#allocation7 + $0x78] sm:$0xff]
    %v146 = vld [vmem:[%s4] sm:$0x1]
    %v148 = vperm.slane %v146, 0
    %150 = vmatpush.msra.mxu0 %v145
    %151 = vmatpush.msra.mxu0 %v144
    %152 = vmatpush.msra.mxu0 %v143
    %153 = vmatpush.msra.mxu0 %v142
    %154 = vmatpush.msra.mxu0 %v141
    %155 = vmatpush.msra.mxu0 %v140
    %156 = vmatpush.msra.mxu0 %v139
    %157 = vmatpush.msra.mxu0 %v138
    %158 = vmatpush.msra.mxu0 %v137
    %159 = vmatpush.msra.mxu0 %v136
    %160 = vmatpush.msra.mxu0 %v135
    %161 = vmatpush.msra.mxu0 %v134
    %162 = vmatpush.msra.mxu0 %v133
    %163 = vmatpush.msra.mxu0 %v132
    %164 = vmatpush.msra.mxu0 %v131
    %165 = vmatpush.msra.mxu0 %v130
    %166 = vmatmul.f32.gmra.mxu0 %v129
    %v167 = vpop.f32.mrf.mxu0
    %v168 = vadd.f32 %v148, %v167
    %169 = vdwg.mxu0
    %v170 = vmax.f32 %v168, 0.0
    %v171 = vld [vmem:[#allocation8] sm:$0xff]
    %v172 = vld [vmem:[#allocation8 + $0x8] sm:$0xff]
    %v173 = vld [vmem:[#allocation8 + $0x10] sm:$0xff]
    %v174 = vld [vmem:[#allocation8 + $0x18] sm:$0xff]
    %v175 = vld [vmem:[#allocation8 + $0x20] sm:$0xff]
    %v176 = vld [vmem:[#allocation8 + $0x28] sm:$0xff]
    %v177 = vld [vmem:[#allocation8 + $0x30] sm:$0xff]
    %v178 = vld [vmem:[#allocation8 + $0x38] sm:$0xff]
    %v179 = vld [vmem:[#allocation8 + $0x40] sm:$0xff]
    %v180 = vld [vmem:[#allocation8 + $0x48] sm:$0xff]
    %v181 = vld [vmem:[#allocation8 + $0x50] sm:$0xff]
    %v182 = vld [vmem:[#allocation8 + $0x58] sm:$0xff]
    %v183 = vld [vmem:[#allocation8 + $0x60] sm:$0xff]
    %v184 = vld [vmem:[#allocation8 + $0x68] sm:$0xff]
    %v185 = vld [vmem:[#allocation8 + $0x70] sm:$0xff]
    %v186 = vld [vmem:[#allocation8 + $0x78] sm:$0xff]
    %v187 = vld [vmem:[%s6] sm:$0x1]
    %v189 = vperm.slane %v187, 0
    %191 = vmatpush.msra.mxu0 %v186
    %192 = vmatpush.msra.mxu0 %v185
    %193 = vmatpush.msra.mxu0 %v184
    %194 = vmatpush.msra.mxu0 %v183
    %195 = vmatpush.msra.mxu0 %v182
    %196 = vmatpush.msra.mxu0 %v181
    %197 = vmatpush.msra.mxu0 %v180
    %198 = vmatpush.msra.mxu0 %v179
    %199 = vmatpush.msra.mxu0 %v178
    %200 = vmatpush.msra.mxu0 %v177
    %201 = vmatpush.msra.mxu0 %v176
    %202 = vmatpush.msra.mxu0 %v175
    %203 = vmatpush.msra.mxu0 %v174
    %204 = vmatpush.msra.mxu0 %v173
    %205 = vmatpush.msra.mxu0 %v172
    %206 = vmatpush.msra.mxu0 %v171
    %207 = vmatmul.f32.gmra.mxu0 %v170
    %v208 = vpop.f32.mrf.mxu0
    %v209 = vadd.f32 %v189, %v208
    %210 = vdwg.mxu0
    %211 = vst [vmem:[#allocation10] sm:$0xff] %v209
    // Predicated region
    $region46: #{tpu_custom_call.1} parent=1 // pred_check
      _
    $region47: #{tpu_custom_call.1} parent=1 // pred_check_branch
      %213 = sbr.rel (0) target = $region49
    $region48: #{tpu_custom_call.1} parent=1 // pred_region
      %215 = vsyncadd [#allocation4], 0
      %s217 = sshll.u32 [#allocation10], 4
      %s218 = int_to_ptr.vmem [resolvable:$true] %s217
      %s219 = sshll.u32 %s7, 4
      %s220 = int_to_ptr.hbm [resolvable:$true] %s219
      %222 = dma.vmem_to_hbm [thread:$0]  %s218, 128, %s220, [#allocation4]
    $region49: #{tpu_custom_call.1} parent=1 // pred_fallthru
      _
    // Predicated region
    $region50: #{tpu_custom_call.1} parent=1 // pred_check
      _
    $region51: #{tpu_custom_call.1} parent=1 // pred_check_branch
      %224 = sbr.rel (0) target = $region53
    $region52: #{tpu_custom_call.1} parent=1 // pred_region
      %226 = dma.done [#allocation4], 128
    $region53: #{tpu_custom_call.1} parent=1 // pred_fallthru
      _
    %227 = vsyncpa [#allocation3], 1
    %228 = vsyncpa [#allocation6], 1
    %229 = vsyncpa [#allocation9], 1
    %230 = vsyncpa [#allocation4], 1

</llo_original>
